<compile_context>
chip_gen: v7x
topology: tpu7x:2x2x1
jax: 0.10.0
libtpu: 0.0.40
codegen_flags: <defaults>
</compile_context>

<pallas_src>
import functools

import jax
import jax.numpy as jnp
from jax.experimental import pallas as pl
from jax.experimental.pallas import tpu as pltpu


def _focal_loss_kernel(logit_ref, target_ref, alpha_ref, out_ref, acc_ref, *,
                       gamma, smooth, num_class, hw, tile_hw, uniform_alpha):
    j = pl.program_id(1)

    @pl.when(j == 0)
    def _init():
        acc_ref[...] = jnp.zeros_like(acc_ref)

    logit = logit_ref[...].astype(jnp.float32)          # (C, T) lane-dense
    idx = target_ref[...]                               # (1, T) int32
    idx = jnp.where(idx == 225, 0, idx)                 # idx[idx == 225] = 0

    c, t = logit.shape
    class_ids = jax.lax.broadcasted_iota(jnp.int32, (c, t), 0)
    one_hot = (class_ids == idx).astype(jnp.float32)    # (C, T)

    lo = smooth / (num_class - 1)
    hi = 1.0 - smooth
    # clip(one_hot, lo, hi) == one_hot*(hi-lo) + lo for one_hot in {0,1}, so
    #   pt = (hi-lo)*sum(one_hot * p) + lo*sum(p) + smooth
    s_sel = jnp.sum(one_hot * logit, axis=0, keepdims=True)   # (1, T)
    s_all = jnp.sum(logit, axis=0, keepdims=True)             # (1, T)
    pt = (hi - lo) * s_sel + lo * s_all + smooth
    logpt = jnp.log(pt)

    one_minus_pt = 1.0 - pt
    g = float(gamma)
    if g == 1.0:
        focal = one_minus_pt
    elif g == int(g) and g > 0:
        focal = one_minus_pt ** int(g)
    else:
        focal = jnp.power(one_minus_pt, g)

    loss = -1.0 * focal * logpt                               # (1, T)
    if not uniform_alpha:
        alpha_col = alpha_ref[...].astype(jnp.float32)        # (C, 1)
        alpha_per = jnp.sum(one_hot * alpha_col, axis=0, keepdims=True)
        loss = alpha_per * loss

    # Mask the padded tail of a ragged last HW tile.
    col = jax.lax.broadcasted_iota(jnp.int32, (1, t), 1) + j * tile_hw
    loss = jnp.where(col < hw, loss, 0.0)

    acc_ref[...] = acc_ref[...] + jnp.sum(loss, axis=(0, 1), keepdims=True)

    @pl.when(j == pl.num_programs(1) - 1)
    def _finalize():
        # Lane-dense (1, 8, 128) output block; every entry holds this batch
        # row's partial sum, host reads element [n, 0, 0].
        out_ref[...] = jnp.zeros_like(out_ref) + acc_ref[...]


def _choose_tile_hw(hw, num_class, elem_bytes, budget_bytes=12 * 1024 * 1024):
    """Largest lane tile (multiple of 128) whose double-buffered logit + int32
    target tiles (incl. sublane padding to 8) fit in `budget_bytes` of VMEM."""
    padded_c = ((num_class + 7) // 8) * 8
    bytes_per_lane = 2 * (padded_c * elem_bytes + 8 * 4)   # 2x = double buffer
    max_t = max(128, (budget_bytes // bytes_per_lane) // 128 * 128)
    if hw <= max_t:
        return hw            # full-extent last dim is always a legal block
    return max_t


def focal_loss(logit, target, *, alpha=None, gamma=1.0, balance_index=0,
               smooth=1e-5, size_average=True, tile_hw=None):
    """Pallas FocalLoss forward.

    `logit` is NCHW (already probabilities, i.e. apply_nonlin=None as in the
    module default; f32 or bf16).  `target` is (N,1,H,W) or (N,H,W) indices.
    """
    num_class = int(logit.shape[1])
    n = int(logit.shape[0])

    # Native layout: (N, C, H*W).  Contiguous reshape only — no transpose,
    # no dtype cast (bf16 stays bf16; kernel upcasts in-register).
    logit3 = logit.reshape(n, num_class, -1)
    hw = int(logit3.shape[-1])
    target3 = target.reshape(n, 1, hw).astype(jnp.int32)

    # ---- alpha setup (mirrors the module __init__/forward paths) ----------
    uniform_alpha = alpha is None
    if alpha is None:
        alpha_vec = jnp.ones((num_class,), jnp.float32)
    elif isinstance(alpha, (list, tuple)):
        a = jnp.asarray(alpha, jnp.float32)
        a = a / a.sum()
        alpha_vec = 1.0 / a    # module does: alpha /= alpha.sum(); alpha = 1/alpha
    elif isinstance(alpha, float):
        alpha_vec = jnp.full((num_class,), 1.0 - alpha, jnp.float32)
        alpha_vec = alpha_vec.at[balance_index].set(alpha)
    else:
        raise TypeError('Not support alpha type')
    alpha_col = alpha_vec.reshape(num_class, 1)

    elem_bytes = jnp.dtype(logit.dtype).itemsize
    if tile_hw is None:
        tile_hw = _choose_tile_hw(hw, num_class, elem_bytes)
    grid = (n, pl.cdiv(hw, tile_hw))

    kernel = functools.partial(
        _focal_loss_kernel,
        gamma=float(gamma), smooth=float(smooth), num_class=num_class,
        hw=hw, tile_hw=tile_hw, uniform_alpha=uniform_alpha)

    partials = pl.pallas_call(
        kernel,
        out_shape=jax.ShapeDtypeStruct((n, 8, 128), jnp.float32),
        grid_spec=pltpu.PrefetchScalarGridSpec(
            num_scalar_prefetch=0,
            grid=grid,
            in_specs=[
                # logits: batch dim squeezed, (C, TILE_HW) lane-dense block
                pl.BlockSpec((None, num_class, tile_hw), lambda b, j: (b, 0, j)),
                # targets: (1, TILE_HW) lane-dense int32 block
                pl.BlockSpec((None, 1, tile_hw), lambda b, j: (b, 0, j)),
                # alpha: tiny full (C, 1) block, constant across the grid
                pl.BlockSpec((num_class, 1), lambda b, j: (0, 0)),
            ],
            out_specs=pl.BlockSpec((1, 8, 128), lambda b, j: (b, 0, 0)),
            scratch_shapes=[pltpu.VMEM((1, 1), jnp.float32)],
        ),
        compiler_params=pltpu.CompilerParams(
            dimension_semantics=("parallel", "arbitrary")),
    )(logit3, target3, alpha_col)

    total = jnp.sum(partials[:, 0, 0])
    if size_average:
        return total / float(n * hw)
    return total


def _focal_loss_ref(logit, target, *, gamma=1.0, smooth=1e-5,
                    size_average=True):
    """Pure-JAX reference mirroring the PyTorch forward (alpha=None path)."""
    num_class = logit.shape[1]
    n, c = logit.shape[0], logit.shape[1]
    logit2 = jnp.transpose(logit.reshape(n, c, -1), (0, 2, 1)).reshape(-1, c)
    logit2 = logit2.astype(jnp.float32)
    idx = target.reshape(-1).astype(jnp.int32)
    idx = jnp.where(idx == 225, 0, idx)
    one_hot = jax.nn.one_hot(idx, num_class, dtype=jnp.float32)
    one_hot_s = jnp.clip(one_hot, smooth / (num_class - 1), 1.0 - smooth)
    pt = jnp.sum(one_hot_s * logit2, axis=1) + smooth
    logpt = jnp.log(pt)
    alpha = jnp.ones((num_class,), jnp.float32)[idx]
    loss = -1.0 * alpha * (1.0 - pt) ** gamma * logpt
    return loss.mean() if size_average else loss.sum()


if __name__ == "__main__":
    key = jax.random.PRNGKey(0)
    k1, k2 = jax.random.split(key)

    N, C, H, W = 2, 4, 16, 16
    # Module default has apply_nonlin=None and takes log(pt), so the inputs
    # are expected to already be probabilities; use a softmax over channels.
    raw = jax.random.normal(k1, (N, C, H, W), dtype=jnp.float32)
    probs = jax.nn.softmax(raw, axis=1)                      # NCHW probabilities
    target = jax.random.randint(k2, (N, 1, H, W), 0, C, dtype=jnp.int32)

    ref = _focal_loss_ref(probs, target, gamma=1.0, smooth=1e-5,
                          size_average=True)

    # Default tiling (single tile per batch row at this size).
    loss = focal_loss(probs, target, alpha=None, gamma=1.0,
                      smooth=1e-5, size_average=True)
    loss = jax.block_until_ready(loss)
    assert jnp.allclose(loss, ref, rtol=1e-4, atol=1e-5), (loss, ref)

    # Forced small tile to exercise the multi-tile accumulation path.
    loss_tiled = focal_loss(probs, target, alpha=None, gamma=1.0,
                            smooth=1e-5, size_average=True, tile_hw=128)
    loss_tiled = jax.block_until_ready(loss_tiled)
    assert jnp.allclose(loss_tiled, ref, rtol=1e-4, atol=1e-5), (loss_tiled, ref)

    print("KERNEL_OK")
</pallas_src>

<mosaic_0001>
module attributes {stable_mosaic.version = 11 : i64} {
  func.func @_focal_loss_kernel(%arg0: i32, %arg1: i32, %arg2: memref<1x4x256xf32, #tpu.memory_space<vmem>>, %arg3: memref<1x1x256xi32, #tpu.memory_space<vmem>>, %arg4: memref<4x1xf32, #tpu.memory_space<vmem>>, %arg5: memref<1x8x128xf32, #tpu.memory_space<vmem>>, %arg6: memref<1x1xf32, #tpu.memory_space<vmem>>) attributes {dimension_semantics = [#tpu.dimension_semantics<parallel>, #tpu.dimension_semantics<arbitrary>], iteration_bounds = array<i64: 2, 1>, scalar_prefetch = 0 : i64, scratch_operands = 1 : i64, tpu.core_type = #tpu.core_type<tc>, window_params = [{transform_indices = @transform_0, window_bounds = array<i64: 1, 4, 256>}, {transform_indices = @transform_1, window_bounds = array<i64: 1, 1, 256>}, {pipeline_mode = #tpu.pipeline_mode<synchronous>, transform_indices = @transform_2, window_bounds = array<i64: 4, 1>}, {transform_indices = @transform_3, window_bounds = array<i64: 1, 8, 128>}]} {
    %c0_i32 = arith.constant 0 : i32
    %0 = arith.cmpi eq, %arg1, %c0_i32 : i32
    %1 = arith.extui %0 : i1 to i32
    %c0_i32_0 = arith.constant 0 : i32
    %2 = arith.cmpi ne, %1, %c0_i32_0 : i32
    scf.if %2 {
      %cst_22 = arith.constant 0.000000e+00 : f32
      %53 = vector.broadcast %cst_22 : f32 to vector<1x1xf32>
      %c0_23 = arith.constant 0 : index
      %c0_24 = arith.constant 0 : index
      %54 = vector.load %arg6[%c0_23, %c0_24] : memref<1x1xf32, #tpu.memory_space<vmem>>, vector<1x1xf32>
      tpu.vector_store %arg6[%c0_23, %c0_24], %53 {strides = array<i32>} : memref<1x1xf32, #tpu.memory_space<vmem>>, vector<1x1xf32>,
    } else {
    }
    %c0 = arith.constant 0 : index
    %c0_1 = arith.constant 0 : index
    %c0_2 = arith.constant 0 : index
    %3 = vector.load %arg2[%c0, %c0_1, %c0_2] : memref<1x4x256xf32, #tpu.memory_space<vmem>>, vector<1x4x256xf32>
    %4 = vector.shape_cast %3 : vector<1x4x256xf32> to vector<4x256xf32>
    %c0_3 = arith.constant 0 : index
    %c0_4 = arith.constant 0 : index
    %c0_5 = arith.constant 0 : index
    %5 = vector.load %arg3[%c0_3, %c0_4, %c0_5] : memref<1x1x256xi32, #tpu.memory_space<vmem>>, vector<1x1x256xi32>
    %6 = vector.shape_cast %5 : vector<1x1x256xi32> to vector<1x256xi32>
    %c225_i32 = arith.constant 225 : i32
    %7 = vector.broadcast %c225_i32 : i32 to vector<1x256xi32>
    %8 = arith.cmpi eq, %6, %7 : vector<1x256xi32>
    %c0_i32_6 = arith.constant 0 : i32
    %9 = vector.broadcast %c0_i32_6 : i32 to vector<1x256xi32>
    %10 = arith.select %8, %9, %6 : vector<1x256xi1>, vector<1x256xi32>
    %11 = tpu.iota {dimensions = array<i32: 0>} : vector<4x256xi32>
    %12 = vector.broadcast %10 : vector<1x256xi32> to vector<4x256xi32>
    %13 = arith.cmpi eq, %11, %12 : vector<4x256xi32>
    %14 = arith.extui %13 : vector<4x256xi1> to vector<4x256xi32>
    %15 = arith.sitofp %14 : vector<4x256xi32> to vector<4x256xf32>
    %16 = arith.mulf %15, %4 : vector<4x256xf32>
    %cst = arith.constant dense<0.000000e+00> : vector<256xf32>
    %17 = vector.multi_reduction <add>, %16, %cst [0] : vector<4x256xf32> to vector<256xf32>
    %18 = vector.shape_cast %17 : vector<256xf32> to vector<1x256xf32>
    %cst_7 = arith.constant dense<0.000000e+00> : vector<256xf32>
    %19 = vector.multi_reduction <add>, %4, %cst_7 [0] : vector<4x256xf32> to vector<256xf32>
    %20 = vector.shape_cast %19 : vector<256xf32> to vector<1x256xf32>
    %cst_8 = arith.constant 0.999986648 : f32
    %21 = vector.broadcast %cst_8 : f32 to vector<1x256xf32>
    %22 = arith.mulf %21, %18 : vector<1x256xf32>
    %cst_9 = arith.constant 3.33333332E-6 : f32
    %23 = vector.broadcast %cst_9 : f32 to vector<1x256xf32>
    %24 = arith.mulf %23, %20 : vector<1x256xf32>
    %25 = arith.addf %22, %24 : vector<1x256xf32>
    %cst_10 = arith.constant 9.99999974E-6 : f32
    %26 = vector.broadcast %cst_10 : f32 to vector<1x256xf32>
    %27 = arith.addf %25, %26 : vector<1x256xf32>
    %28 = math.log %27 : vector<1x256xf32>
    %cst_11 = arith.constant 1.000000e+00 : f32
    %29 = vector.broadcast %cst_11 : f32 to vector<1x256xf32>
    %30 = arith.subf %29, %27 : vector<1x256xf32>
    %cst_12 = arith.constant -1.000000e+00 : f32
    %31 = vector.broadcast %cst_12 : f32 to vector<1x256xf32>
    %32 = arith.mulf %31, %30 : vector<1x256xf32>
    %33 = arith.mulf %32, %28 : vector<1x256xf32>
    %34 = tpu.iota {dimensions = array<i32: 1>} : vector<1x256xi32>
    %c256_i32 = arith.constant 256 : i32
    %35 = arith.muli %arg1, %c256_i32 : i32
    %36 = vector.broadcast %35 : i32 to vector<1x256xi32>
    %37 = arith.addi %34, %36 : vector<1x256xi32>
    %c256_i32_13 = arith.constant 256 : i32
    %38 = vector.broadcast %c256_i32_13 : i32 to vector<1x256xi32>
    %39 = arith.cmpi slt, %37, %38 : vector<1x256xi32>
    %cst_14 = arith.constant 0.000000e+00 : f32
    %40 = vector.broadcast %cst_14 : f32 to vector<1x256xf32>
    %41 = arith.select %39, %33, %40 : vector<1x256xi1>, vector<1x256xf32>
    %c0_15 = arith.constant 0 : index
    %c0_16 = arith.constant 0 : index
    %42 = vector.load %arg6[%c0_15, %c0_16] : memref<1x1xf32, #tpu.memory_space<vmem>>, vector<1x1xf32>
    %43 = vector.shape_cast %41 : vector<1x256xf32> to vector<1x1x256xf32>
    %cst_17 = arith.constant dense<0.000000e+00> : vector<1xf32>
    %44 = vector.multi_reduction <add>, %43, %cst_17 [1, 2] : vector<1x1x256xf32> to vector<1xf32>
    %45 = vector.shape_cast %44 : vector<1xf32> to vector<1x1x1xf32>
    %46 = vector.extract %45[0, 0, 0] : f32 from vector<1x1x1xf32>
    %47 = vector.broadcast %46 : f32 to vector<1x1xf32>
    %48 = arith.addf %42, %47 : vector<1x1xf32>
    %c0_18 = arith.constant 0 : index
    %c0_19 = arith.constant 0 : index
    %49 = vector.load %arg6[%c0_18, %c0_19] : memref<1x1xf32, #tpu.memory_space<vmem>>, vector<1x1xf32>
    tpu.vector_store %arg6[%c0_18, %c0_19], %48 {strides = array<i32>} : memref<1x1xf32, #tpu.memory_space<vmem>>, vector<1x1xf32>,
    %c0_i32_20 = arith.constant 0 : i32
    %50 = arith.cmpi eq, %arg1, %c0_i32_20 : i32
    %51 = arith.extui %50 : i1 to i32
    %c0_i32_21 = arith.constant 0 : i32
    %52 = arith.cmpi ne, %51, %c0_i32_21 : i32
    scf.if %52 {
      %cst_22 = arith.constant 0.000000e+00 : f32
      %53 = vector.broadcast %cst_22 : f32 to vector<1x8x128xf32>
      %c0_23 = arith.constant 0 : index
      %c0_24 = arith.constant 0 : index
      %54 = vector.load %arg6[%c0_23, %c0_24] : memref<1x1xf32, #tpu.memory_space<vmem>>, vector<1x1xf32>
      %55 = vector.shape_cast %54 : vector<1x1xf32> to vector<1x1x1xf32>
      %56 = vector.broadcast %55 : vector<1x1x1xf32> to vector<1x8x128xf32>
      %57 = arith.addf %53, %56 : vector<1x8x128xf32>
      %c0_25 = arith.constant 0 : index
      %c0_26 = arith.constant 0 : index
      %c0_27 = arith.constant 0 : index
      %58 = vector.load %arg5[%c0_25, %c0_26, %c0_27] : memref<1x8x128xf32, #tpu.memory_space<vmem>>, vector<1x8x128xf32>
      tpu.vector_store %arg5[%c0_25, %c0_26, %c0_27], %57 {strides = array<i32>} : memref<1x8x128xf32, #tpu.memory_space<vmem>>, vector<1x8x128xf32>,
    } else {
    }
    return
  }
  func.func @transform_0(%arg0: i32, %arg1: i32) -> (i32, i32, i32) {
    %c0_i32 = arith.constant 0 : i32
    %c0_i32_0 = arith.constant 0 : i32
    return %arg0, %c0_i32, %arg1 : i32, i32, i32
  }
  func.func @transform_1(%arg0: i32, %arg1: i32) -> (i32, i32, i32) {
    %c0_i32 = arith.constant 0 : i32
    %c0_i32_0 = arith.constant 0 : i32
    return %arg0, %c0_i32, %arg1 : i32, i32, i32
  }
  func.func @transform_2(%arg0: i32, %arg1: i32) -> (i32, i32) {
    %c0_i32 = arith.constant 0 : i32
    %c0_i32_0 = arith.constant 0 : i32
    %c0_i32_1 = arith.constant 0 : i32
    return %c0_i32, %c0_i32_0 : i32, i32
  }
  func.func @transform_3(%arg0: i32, %arg1: i32) -> (i32, i32, i32) {
    %c0_i32 = arith.constant 0 : i32
    %c0_i32_0 = arith.constant 0 : i32
    %c0_i32_1 = arith.constant 0 : i32
    return %arg0, %c0_i32, %c0_i32_0 : i32, i32, i32
  }
}

</mosaic_0001>

<llo_original>
// kernel: tpu_custom_call.1
$region0: #{tpu_custom_call.1}
  #allocation0 [shape = 'u32[]', space=smem, size = 0x4, offset = 0x4, fixed_abs, tag = 'smem constant byte address 0x4 - core index']
  #allocation1 [shape = 'u32[144,128]{1,0:T(1,128)}', space=vmem, size = 0x12000, scoped, tag = 'internal scratch']
  #allocation2 [shape = 'f32[1,1]{1,0:T(1,128)}', space=vmem, size = 0x200, scoped, tag = 'scratch operand']
  %s0 = inlined_call_operand.hbm [shape: f32[2,4,256], index: 0, kind: input, shape index: {}]
  %s1 = inlined_call_operand.vmem [shape: s32[2,1,256], index: 1, kind: input, shape index: {}]
  %s2 = inlined_call_operand.vmem [shape: f32[4,1], index: 2, kind: input, shape index: {}]
  %s3 = inlined_call_operand.hbm [shape: f32[2,8,128], index: 3, kind: output, shape index: {}]
  %s4 = sld [smem:[#allocation0]]
  $region57: #{tpu_custom_call.1} parent=0
    _
  %s6 = ssub.s32 1, %s4
  %s7 = scalar_select 0, %s6, %s4
  $region1: #{tpu_custom_call.1} parent=0
    #allocation3 [shape = 'u8[8192]{0}', space=vmem, size = 0x2000, scoped, tag = 'input window, operand 0']
    #allocation4 [shape = 's32[2]{0}', space=sflag, size = 0x8, scoped, tag = 'scoped memory for tpu_custom_call.1']
    #allocation5 [shape = 's32[2]{0}', space=sflag, size = 0x8, scoped, tag = 'scoped memory for tpu_custom_call.1']
    #allocation6 [shape = 'u8[8192]{0}', space=vmem, size = 0x2000, scoped, tag = 'output window, operand 0']
    %8 = vsyncpa [#allocation4], 0
    %s9 = scalar_lea.sflag [#allocation4], 1
    %10 = vsyncpa %s9, 0
    %11 = vsyncpa [#allocation5], 0
    %s12 = scalar_lea.sflag [#allocation5], 1
    %13 = vsyncpa %s12, 0
    loop: start=0, step=1, limit=4
    $region2: #{tpu_custom_call.1} parent=1 // loop_pre_header
      _
    $region3: #{tpu_custom_call.1} parent=1 // loop_header
      %s15 = sphi 0, %s19
      %p16 = scmp.ge.s32.totalorder %s15, 4
      %s22 = sphi 0, %s34
      %s23 = sphi 0, %s30
      %s24 = sphi 0, %s22
      %s25 = sphi 0, %s23
      %s26 = sphi 0, %s24
      %s27 = sphi 0, %s25
      %s39 = sphi 0, %s41
      %s42 = sphi 0, %s39
      %s43 = sphi 0, %s42
      %s59 = sphi 0, %s43
      %s67 = sphi 0, %s69
      %s70 = sphi 0, %s67
      %s71 = sphi 0, %s70
      %s87 = sphi 0, %s71
      %s91 = sphi 0, %s91
      %s93 = sphi 0, %s91
      %s94 = sphi 0, %s93
      %s108 = sphi 0, %s94
      %s114 = sphi 0, %s116
      %s117 = sphi 0, %s114
      %s118 = sphi 0, %s117
      %s134 = sphi 0, %s118
    $region4: #{tpu_custom_call.1} parent=1 // loop_header_branch
      %18 = sbr.rel (%p16) target = $region8
    $region5: #{tpu_custom_call.1} parent=1 // loop_body
      %s20 = ssub.s32 %s15, 1
      %s21 = ssub.s32 %s15, 2
      %s28 = sadd.s32 1, %s23
      %p29 = scmp.ge.s32.totalorder %s28, 1
      %s30 = scalar_select %p29, 0, %s28
      %s31 = sadd.s32 1, %s22
      %s32 = scalar_select %p29, %s31, %s22
      %p33 = scmp.ge.s32.totalorder %s32, 2
      %s34 = scalar_select %p33, 0, %s32
      %s35 = ssub.s32 %s22, %s34
      %s36 = ssub.s32 %s23, %s30
      %s37 = sor.u32 %s35, %s36
      %p38 = scmp.eq.s32.totalorder %s37, 0
      %s40 = sadd.s32 %s39, 1
      %s41 = scalar_select %p38, %s39, %s40
      %p44 = pneg %p38
      %p45 = scmp.eq.s32.totalorder %s15, 1
      %p46 = por %p44, %p45
      %p47 = scmp.ne.s32.totalorder %s39, %s42
      %p48 = scmp.eq.s32.totalorder %s15, 0
      %p49 = por %p47, %p48
      %p50 = scmp.ne.s32.totalorder %s39, %s42
      %p51 = scmp.eq.s32.totalorder %s20, 1
      %p52 = por %p50, %p51
      %p53 = scmp.ne.s32.totalorder %s42, %s43
      %p54 = scmp.eq.s32.totalorder %s20, 0
      %p55 = por %p53, %p54
      %p56 = scmp.ne.s32.totalorder %s42, %s43
      %p57 = scmp.eq.s32.totalorder %s21, 1
      %p58 = por %p56, %p57
      %p60 = scmp.ne.s32.totalorder %s43, %s59
      %p61 = scmp.eq.s32.totalorder %s21, 0
      %p62 = por %p60, %p61
      %s63 = ssub.s32 %s22, %s34
      %s64 = ssub.s32 %s23, %s30
      %s65 = sor.u32 %s63, %s64
      %p66 = scmp.eq.s32.totalorder %s65, 0
      %s68 = sadd.s32 %s67, 1
      %s69 = scalar_select %p66, %s67, %s68
      %p72 = pneg %p66
      %p73 = scmp.eq.s32.totalorder %s15, 1
      %p74 = por %p72, %p73
      %p75 = scmp.ne.s32.totalorder %s67, %s70
      %p76 = scmp.eq.s32.totalorder %s15, 0
      %p77 = por %p75, %p76
      %p78 = scmp.ne.s32.totalorder %s67, %s70
      %p79 = scmp.eq.s32.totalorder %s20, 1
      %p80 = por %p78, %p79
      %p81 = scmp.ne.s32.totalorder %s70, %s71
      %p82 = scmp.eq.s32.totalorder %s20, 0
      %p83 = por %p81, %p82
      %p84 = scmp.ne.s32.totalorder %s70, %s71
      %p85 = scmp.eq.s32.totalorder %s21, 1
      %p86 = por %p84, %p85
      %p88 = scmp.ne.s32.totalorder %s71, %s87
      %p89 = scmp.eq.s32.totalorder %s21, 0
      %p90 = por %p88, %p89
      %s92 = sadd.s32 %s91, 1
      %p95 = scmp.eq.s32.totalorder %s15, 1
      %p96 = scmp.ne.s32.totalorder %s91, %s93
      %p97 = scmp.eq.s32.totalorder %s15, 0
      %p98 = por %p96, %p97
      %p99 = scmp.ne.s32.totalorder %s91, %s93
      %p100 = scmp.eq.s32.totalorder %s20, 1
      %p101 = por %p99, %p100
      %p102 = scmp.ne.s32.totalorder %s93, %s94
      %p103 = scmp.eq.s32.totalorder %s20, 0
      %p104 = por %p102, %p103
      %p105 = scmp.ne.s32.totalorder %s93, %s94
      %p106 = scmp.eq.s32.totalorder %s21, 1
      %p107 = por %p105, %p106
      %p109 = scmp.ne.s32.totalorder %s94, %s108
      %p110 = scmp.eq.s32.totalorder %s21, 0
      %p111 = por %p109, %p110
      %s112 = ssub.s32 %s22, %s34
      %p113 = scmp.eq.s32.totalorder %s112, 0
      %s115 = sadd.s32 %s114, 1
      %s116 = scalar_select %p113, %s114, %s115
      %p119 = pneg %p113
      %p120 = scmp.eq.s32.totalorder %s15, 1
      %p121 = por %p119, %p120
      %p122 = scmp.ne.s32.totalorder %s114, %s117
      %p123 = scmp.eq.s32.totalorder %s15, 0
      %p124 = por %p122, %p123
      %p125 = scmp.ne.s32.totalorder %s114, %s117
      %p126 = scmp.eq.s32.totalorder %s20, 1
      %p127 = por %p125, %p126
      %p128 = scmp.ne.s32.totalorder %s117, %s118
      %p129 = scmp.eq.s32.totalorder %s20, 0
      %p130 = por %p128, %p129
      %p131 = scmp.ne.s32.totalorder %s117, %s118
      %p132 = scmp.eq.s32.totalorder %s21, 1
      %p133 = por %p131, %p132
      %p135 = scmp.ne.s32.totalorder %s118, %s134
      %p136 = scmp.eq.s32.totalorder %s21, 0
      %p137 = por %p135, %p136
      %p138 = scmp.le.s32.totalorder 1, %s15
      %p139 = scmp.lt.s32.totalorder %s15, 3
      %p140 = pnand %p138, %p139
      %p141 = pneg %p140
      // Predicated region
      $region9: #{tpu_custom_call.1} parent=5 // pred_check
        _
      $region10: #{tpu_custom_call.1} parent=5 // pred_check_branch
        %143 = sbr.rel (%p140) target = $region12
      $region11: #{tpu_custom_call.1} parent=5 // pred_region
        %s144 = ssub.s32 %s15, 1
        // Predicated region
        $region13: #{tpu_custom_call.1} parent=11 // pred_check
          %p145 = pneg %p104
        $region14: #{tpu_custom_call.1} parent=11 // pred_check_branch
          %147 = sbr.rel (%p145) target = $region16
        $region15: #{tpu_custom_call.1} parent=11 // pred_region
          _
        $region16: #{tpu_custom_call.1} parent=11 // pred_fallthru
          _
      $region12: #{tpu_custom_call.1} parent=5 // pred_fallthru
        _
      %p148 = scmp.lt.s32.totalorder %s15, 2
      // Predicated region
      $region17: #{tpu_custom_call.1} parent=5 // pred_check
        %p149 = pneg %p148
      $region18: #{tpu_custom_call.1} parent=5 // pred_check_branch
        %151 = sbr.rel (%p149) target = $region20
      $region19: #{tpu_custom_call.1} parent=5 // pred_region
        // Predicated region
        $region21: #{tpu_custom_call.1} parent=19 // pred_check
          %p152 = pneg %p49
        $region22: #{tpu_custom_call.1} parent=19 // pred_check_branch
          %154 = sbr.rel (%p152) target = $region24
        $region23: #{tpu_custom_call.1} parent=19 // pred_region
          %s155 = sand.u32 %s39, 1
          %s156 = scalar_lea.sflag [#allocation4], %s155
          %s157 = sand.u32 %s39, 1
          %s158 = smul.addr %s157, 8
          %s159 = scalar_lea.vmem [#allocation3], %s158
          %s160 = smul.u32 2, %s23
          %s162 = ssub.s32 128, 128
          %163 = vsyncadd %s156, %s162
          %s164 = smul.addr %s22, 2
          %s165 = sadd.s32 %s160, %s164
          %s166 = smul.addr %s165, 64
          %s167 = scalar_lea.hbm %s0, %s166
          %s169 = sshll.u32 %s159, 4
          %s170 = int_to_ptr.vmem [resolvable:$true] %s169
          %172 = dma.hbm_to_vmem [thread:$0]  %s167, 128, %s170, %s156
        $region24: #{tpu_custom_call.1} parent=19 // pred_fallthru
          _
        // Predicated region
        $region25: #{tpu_custom_call.1} parent=19 // pred_check
          %p173 = pneg %p77
        $region26: #{tpu_custom_call.1} parent=19 // pred_check_branch
          %175 = sbr.rel (%p173) target = $region28
        $region27: #{tpu_custom_call.1} parent=19 // pred_region
          %s176 = smul.u32 2, %s23
          %p177 = scmp.lt.s32.totalorder %s22, 1
          %s178 = scalar_select %p177, %s22, 1
          %p179 = scmp.lt.s32.totalorder %s176, 1
          %s180 = scalar_select %p179, %s176, 1
          %s181 = smul.addr %s178, 2
          %s182 = sadd.s32 %s180, %s181
          %s183 = scalar_lea.vmem %s1, %s182
          %s184 = smul.u32 2, %s23
        $region28: #{tpu_custom_call.1} parent=19 // pred_fallthru
          _
      $region20: #{tpu_custom_call.1} parent=5 // pred_fallthru
        _
      %p185 = scmp.le.s32.totalorder 1, %s15
      %p186 = scmp.lt.s32.totalorder %s15, 3
      %p187 = pnand %p185, %p186
      %p188 = pneg %p187
      // Predicated region
      $region29: #{tpu_custom_call.1} parent=5 // pred_check
        _
      $region30: #{tpu_custom_call.1} parent=5 // pred_check_branch
        %190 = sbr.rel (%p187) target = $region32
      $region31: #{tpu_custom_call.1} parent=5 // pred_region
        %s191 = ssub.s32 %s15, 1
        %s192 = sand.u32 %s42, 1
        %s193 = scalar_lea.sflag [#allocation4], %s192
        %s194 = sand.u32 %s42, 1
        %s195 = smul.addr %s194, 8
        %s196 = scalar_lea.vmem [#allocation3], %s195
        // Predicated region
        $region33: #{tpu_custom_call.1} parent=31 // pred_check
          %p197 = pneg %p55
        $region34: #{tpu_custom_call.1} parent=31 // pred_check_branch
          %199 = sbr.rel (%p197) target = $region36
        $region35: #{tpu_custom_call.1} parent=31 // pred_region
          %200 = dma.done %s193, 128
        $region36: #{tpu_custom_call.1} parent=31 // pred_fallthru
          _
        %s201 = sand.u32 %s42, 1
        %s202 = scalar_lea.sflag [#allocation4], %s201
        %s203 = sand.u32 %s42, 1
        %s204 = smul.addr %s203, 8
        %s205 = scalar_lea.vmem [#allocation3], %s204
        %p206 = pneg %p55
        %p207 = pneg %p52
        %s208 = smul.u32 2, %s25
        %p209 = scmp.lt.s32.totalorder %s24, 1
        %s210 = scalar_select %p209, %s24, 1
        %p211 = scmp.lt.s32.totalorder %s208, 1
        %s212 = scalar_select %p211, %s208, 1
        %s213 = smul.addr %s210, 2
        %s214 = sadd.s32 %s212, %s213
        %s215 = scalar_lea.vmem %s1, %s214
        %p216 = pneg %p83
        %p217 = pneg %p80
        %p218 = pneg %p104
        %p219 = pneg %p101
        %p220 = pneg %p130
        %p221 = pneg %p127
        %s222 = sand.u32 %s117, 1
        %s223 = scalar_lea.sflag [#allocation5], %s222
        %s224 = sand.u32 %s117, 1
        %s225 = smul.addr %s224, 8
        %s226 = scalar_lea.vmem [#allocation6], %s225
        %s227 = smul.u32 2, %s25
        %s228 = smul.u32 2, %s25
        %p229 = scmp.lt.s32.totalorder %s24, 1
        %s230 = scalar_select %p229, %s24, 1
        %p231 = scmp.lt.s32.totalorder %s228, 1
        %s232 = scalar_select %p231, %s228, 1
        %s233 = smul.addr %s230, 2
        %s234 = sadd.s32 %s232, %s233
        %s235 = scalar_lea.vmem %s1, %s234
        %s236 = smul.u32 2, %s25
        %p237 = scmp.eq.s32.totalorder %s25, 0
        // Predicated region
        $region37: #{tpu_custom_call.1} parent=31 // pred_check
          %p238 = pneg %p237
        $region38: #{tpu_custom_call.1} parent=31 // pred_check_branch
          %240 = sbr.rel (%p238) target = $region40
        $region39: #{tpu_custom_call.1} parent=31 // pred_region
          %vm241 = vcmask 0
          %242 = vst.msk [vmem:[#allocation2] sm:$0x1] %vm241, 0.0
        $region40: #{tpu_custom_call.1} parent=31 // pred_fallthru
          _
        %v243 = vld [vmem:[%s196] sm:$0xff]
        %v244 = vld [vmem:[%s235] sm:$0x3]
        %vm245 = vcmp.eq.s32.totalorder %v244, 225
        %v246 = vsel %vm245, 0, %v244
        %v247 = vlaneseq
        %v248 = vshrl.u32 %v247, 7
        %v249 = vlaneseq
        %v250 = vshrl.u32 %v249, 7
        %v251 = vsub.s32 0, %v250
        %v252 = vrot.slane %v246, %v251
        %v253 = vlaneseq
        %v254 = vshrl.u32 %v253, 7
        %v255 = vsub.s32 1, %v254
        %v256 = vrot.slane %v246, %v255
        %vm257 = vcmp.eq.s32.totalorder %v248, %v252
        %vm258 = vcmp.eq.s32.totalorder %v248, %v256
        %v259 = vsel %vm257, 1, 0
        %v260 = vsel %vm258, 1, 0
        %v261 = vcvt.s32.f32 %v259
        %v262 = vcvt.s32.f32 %v260
        %v264 = vcombine.high %v243, %v243
        %v266 = vmul.f32 %v261, %v243
        %v267 = vmul.f32 %v262, %v264
        %vm268 = vcmask 1043456
        %v269 = vsel %vm268, %v266, 0.0
        %v270 = vrot.slane %v269, 4
        %v271 = vadd.f32 %v269, %v270
        %v272 = vrot.slane %v271, 2
        %v273 = vadd.f32 %v271, %v272
        %v274 = vrot.slane %v273, 1
        %v275 = vadd.f32 %v273, %v274
        %v276 = vsel %vm268, %v267, 0.0
        %v277 = vrot.slane %v276, 4
        %v278 = vadd.f32 %v276, %v277
        %v279 = vrot.slane %v278, 2
        %v280 = vadd.f32 %v278, %v279
        %v281 = vrot.slane %v280, 1
        %v282 = vadd.f32 %v280, %v281
        %v283 = vsel %vm268, %v243, 0.0
        %v284 = vrot.slane %v283, 4
        %v285 = vadd.f32 %v283, %v284
        %v286 = vrot.slane %v285, 2
        %v287 = vadd.f32 %v285, %v286
        %v288 = vrot.slane %v287, 1
        %v289 = vadd.f32 %v287, %v288
        %v290 = vsel %vm268, %v264, 0.0
        %v291 = vrot.slane %v290, 4
        %v292 = vadd.f32 %v290, %v291
        %v293 = vrot.slane %v292, 2
        %v294 = vadd.f32 %v292, %v293
        %v295 = vrot.slane %v294, 1
        %v296 = vadd.f32 %v294, %v295
        %v297 = vmul.f32 %v275, 0.99998665
        %v298 = vmul.f32 %v282, 0.99998665
        %v299 = vmul.f32 %v289, 3.3333333e-06
        %v300 = vmul.f32 %v296, 3.3333333e-06
        %v301 = vadd.f32 %v297, %v299
        %v302 = vadd.f32 %v298, %v300
        %v303 = vadd.f32 %v301, 1e-05
        %v304 = vadd.f32 %v302, 1e-05
        %v305 = vlog2.pop %v303
        %v306 = vmul.f32 %v305, 0.6931472
        %v307 = vlog2.pop %v304
        %v308 = vmul.f32 %v307, 0.6931472
        %v309 = vsub.f32 1.0, %v303
        %v310 = vsub.f32 1.0, %v304
        %v311 = vmul.f32 %v309, -1.0
        %v312 = vmul.f32 %v310, -1.0
        %v313 = vmul.f32 %v311, %v306
        %v314 = vmul.f32 %v312, %v308
        %v315 = vlaneseq
        %v316 = vand.u32 %v315, 127
        %v317 = vadd.s32 %v316, 128
        %s318 = smul.u32 %s25, 256
        %v319 = vstv %s318
        %v320 = vadd.s32 %v316, %v319
        %v321 = vadd.s32 %v317, %v319
        %vm322 = vcmp.lt.s32.totalorder %v320, 256
        %vm323 = vcmp.lt.s32.totalorder %v321, 256
        %v324 = vsel %vm322, %v313, 0.0
        %v325 = vsel %vm323, %v314, 0.0
        %v326 = vld [vmem:[#allocation2] sm:$0x1]
        %vm327 = vcmask 1040384
        %v328 = vsel %vm327, %v324, 0.0
        %v329 = vsel %vm327, %v325, 0.0
        %v330 = vadd.f32 %v328, %v329
        %331 = vadd.xlane.f32.xlu0 %v330
        %v332 = vpop.xlane.xlu0 %331
        %v333 = vrot.slane %v332, 4
        %v334 = vadd.f32 %v332, %v333
        %v335 = vrot.slane %v334, 2
        %v336 = vadd.f32 %v334, %v335
        %v337 = vrot.slane %v336, 1
        %v338 = vadd.f32 %v336, %v337
        %s339 = vtos %v338
        %v340 = vstv %s339
        %v341 = vadd.f32 %v326, %v340
        %vm342 = vcmask 0
        %343 = vst.msk [vmem:[#allocation2] sm:$0x1] %vm342, %v341
        // Predicated region
        $region41: #{tpu_custom_call.1} parent=31 // pred_check
          %p344 = pneg %p237
        $region42: #{tpu_custom_call.1} parent=31 // pred_check_branch
          %346 = sbr.rel (%p344) target = $region44
        $region43: #{tpu_custom_call.1} parent=31 // pred_region
          %v347 = vld [vmem:[#allocation2] sm:$0x1]
          %v349 = vlaneseq
          %v350 = vshrl.u32 %v349, 7
          %v351 = vsub.s32 0, %v350
          %v352 = vrot.slane %v347, %v351
          %353 = vset.pattern.permute.xlu0 0
          %354 = vperm.xlu0 %353, %v352
          %v355 = vpop.permute.xlu0 %354
          %v357 = vadd.f32 %v355, 0.0
          %358 = vst [vmem:[%s226] sm:$0xff] %v357
        $region44: #{tpu_custom_call.1} parent=31 // pred_fallthru
          _
        %s359 = sand.u32 %s117, 1
        %s360 = scalar_lea.sflag [#allocation5], %s359
        %s361 = sand.u32 %s117, 1
        %s362 = smul.addr %s361, 8
        %s363 = scalar_lea.vmem [#allocation6], %s362
        // Predicated region
        $region45: #{tpu_custom_call.1} parent=31 // pred_check
          %p364 = pneg %p127
        $region46: #{tpu_custom_call.1} parent=31 // pred_check_branch
          %366 = sbr.rel (%p364) target = $region48
        $region47: #{tpu_custom_call.1} parent=31 // pred_region
          %s368 = ssub.s32 128, 128
          %369 = vsyncadd %s360, %s368
          %s370 = smul.addr %s24, 128
          %s371 = scalar_lea.hbm %s3, %s370
          %s373 = sshll.u32 %s363, 4
          %s374 = int_to_ptr.vmem [resolvable:$true] %s373
          %376 = dma.vmem_to_hbm [thread:$0]  %s374, 128, %s371, %s360
        $region48: #{tpu_custom_call.1} parent=31 // pred_fallthru
          _
      $region32: #{tpu_custom_call.1} parent=5 // pred_fallthru
        _
      %p377 = scmp.le.s32.totalorder 2, %s15
      // Predicated region
      $region49: #{tpu_custom_call.1} parent=5 // pred_check
        %p378 = pneg %p377
      $region50: #{tpu_custom_call.1} parent=5 // pred_check_branch
        %380 = sbr.rel (%p378) target = $region52
      $region51: #{tpu_custom_call.1} parent=5 // pred_region
        %s381 = ssub.s32 %s15, 2
        // Predicated region
        $region53: #{tpu_custom_call.1} parent=51 // pred_check
          %p382 = pneg %p133
        $region54: #{tpu_custom_call.1} parent=51 // pred_check_branch
          %384 = sbr.rel (%p382) target = $region56
        $region55: #{tpu_custom_call.1} parent=51 // pred_region
          %s385 = sand.u32 %s118, 1
          %s386 = scalar_lea.sflag [#allocation5], %s385
          %s387 = sand.u32 %s118, 1
          %s388 = smul.addr %s387, 8
          %s389 = scalar_lea.vmem [#allocation6], %s388
          %390 = dma.done %s386, 128
        $region56: #{tpu_custom_call.1} parent=51 // pred_fallthru
          _
      $region52: #{tpu_custom_call.1} parent=5 // pred_fallthru
        _
    $region6: #{tpu_custom_call.1} parent=1 // loop_footer
      %s19 = sadd.s32 1, %s15
    $region7: #{tpu_custom_call.1} parent=1 // loop_footer_branch
      %14 = sbr.rel target = $region3
    $region8: #{tpu_custom_call.1} parent=1 // loop_exit
      _
    %391 = vsyncpa [#allocation4], 1
    %s392 = scalar_lea.sflag [#allocation4], 1
    %393 = vsyncpa %s392, 1
    %394 = vsyncpa [#allocation5], 1
    %s395 = scalar_lea.sflag [#allocation5], 1
    %396 = vsyncpa %s395, 1

</llo_original>
